<compile_context>
chip_gen: v7x
topology: tpu7x:2x2x1
jax: 0.10.0
libtpu: 0.0.40
codegen_flags: <defaults>
</compile_context>

<pallas_src>
import jax
import jax.numpy as jnp
from jax.experimental import pallas as pl
from jax.experimental.pallas import tpu as pltpu  # noqa: F401  (TPU backend)

# Leaky neuron constants (betas are irrelevant for one step from zero membrane).
BETA1, TH1 = 3.0, 0.5
BETA2, TH2 = 3.0, 0.5

IN_DIM, HID_DIM, OUT_DIM = 784, 200, 10
HID_PAD = 256                      # lane-dense (multiple of 128) hidden dim


def _edge_snn_kernel(x_ref, w1_ref, b1_ref, w2_ref, b2_ref, spk2_ref, mem2_ref):
    # x arrives f32 (B, 784); cast to bf16 in-kernel (overlaps with weight DMA).
    x = x_ref[...].astype(jnp.bfloat16)

    # fc1 (784 -> 256 padded; logical 784 -> 200) + lif1
    cur1 = jnp.dot(x, w1_ref[...], preferred_element_type=jnp.float32) + b1_ref[...]
    # padded hidden columns: 0-weights + 0-bias = 0 -> (0 > 0.5) = 0, never spike.
    spk1 = (cur1 > TH1).astype(jnp.bfloat16)      # mem1 = cur1 (zero-init state)

    # fc2 (256 -> 10 padded-K; logical 200 -> 10) + lif2
    cur2 = jnp.dot(spk1, w2_ref[...], preferred_element_type=jnp.float32) + b2_ref[...]
    spk2_ref[...] = (cur2 > TH2).astype(jnp.float32)
    mem2_ref[...] = cur2                          # mem2 = cur2 (zero-init state)


def init_params(key):
    """PyTorch-default-style init: U(-1/sqrt(fan_in), 1/sqrt(fan_in)), f32."""
    def linear(k, fan_in, fan_out):
        kw, kb = jax.random.split(k)
        bound = 1.0 / (fan_in ** 0.5)
        w = jax.random.uniform(kw, (fan_in, fan_out), jnp.float32, -bound, bound)
        b = jax.random.uniform(kb, (1, fan_out), jnp.float32, -bound, bound)
        return w, b

    k1, k2 = jax.random.split(key)
    w1, b1 = linear(k1, IN_DIM, HID_DIM)   # fc1: 784 -> 200
    w2, b2 = linear(k2, HID_DIM, OUT_DIM)  # fc2: 200 -> 10
    return (w1, b1, w2, b2)


def prepare_params(params):
    """Pad only the hidden (lane) dim to 256 and cast weights to bf16.

    Do this once and reuse the device-resident padded weights per call.
    No K-padding: w1 keeps its 784 rows, x is consumed unpadded.
    """
    w1, b1, w2, b2 = params
    w1p = jnp.pad(w1, ((0, 0), (0, HID_PAD - HID_DIM))).astype(jnp.bfloat16)  # (784, 256)
    b1p = jnp.pad(b1, ((0, 0), (0, HID_PAD - HID_DIM)))                       # (1, 256) f32
    w2p = jnp.pad(w2, ((0, HID_PAD - HID_DIM), (0, 0))).astype(jnp.bfloat16)  # (256, 10)
    b2p = b2                                                                  # (1, 10) f32
    return (w1p, b1p, w2p, b2p)


def edge_spiking_network(x, prepared_params):
    """Returns (spk2, mem2), each [B, 10] float32."""
    B = x.shape[0]
    w1p, b1p, w2p, b2p = prepared_params
    x = x.astype(jnp.float32)                     # matches x.to(torch.float32)

    out_shape = (jax.ShapeDtypeStruct((B, OUT_DIM), jnp.float32),
                 jax.ShapeDtypeStruct((B, OUT_DIM), jnp.float32))

    flops = 2 * B * (IN_DIM * HID_PAD + HID_PAD * OUT_DIM)
    bytes_accessed = (x.size * 4 + w1p.size * 2 + b1p.size * 4
                      + w2p.size * 2 + b2p.size * 4 + 2 * B * OUT_DIM * 4)

    # No grid / specs: single invocation, whole arrays resident in VMEM.
    return pl.pallas_call(
        _edge_snn_kernel,
        out_shape=out_shape,
        cost_estimate=pl.CostEstimate(
            flops=flops, transcendentals=0, bytes_accessed=bytes_accessed),
    )(x, w1p, b1p, w2p, b2p)


if __name__ == "__main__":
    key = jax.random.PRNGKey(0)
    k_params, k_x = jax.random.split(key)

    params = init_params(k_params)
    prepared = prepare_params(params)

    # Small batch of flattened "MNIST-like" inputs in [0, 1).
    B = 8
    x = jax.random.uniform(k_x, (B, IN_DIM), jnp.float32)

    spk2, mem2 = edge_spiking_network(x, prepared)
    jax.block_until_ready((spk2, mem2))

    assert spk2.shape == (B, OUT_DIM) and mem2.shape == (B, OUT_DIM)
    assert spk2.dtype == jnp.float32 and mem2.dtype == jnp.float32
    # spikes must be exactly 0/1
    assert bool(jnp.all((spk2 == 0.0) | (spk2 == 1.0)))

    # Same-precision pure-JAX reference (validates kernel plumbing; bf16 weight
    # rounding vs. the f32 PyTorch reference is an expected, documented delta).
    w1p, b1p, w2p, b2p = prepared
    xb = x.astype(jnp.bfloat16)
    cur1_ref = jnp.dot(xb, w1p, preferred_element_type=jnp.float32) + b1p
    spk1_ref = (cur1_ref > TH1).astype(jnp.bfloat16)
    cur2_ref = jnp.dot(spk1_ref, w2p, preferred_element_type=jnp.float32) + b2p
    assert bool(jnp.allclose(mem2, cur2_ref, atol=1e-3, rtol=1e-3))

    print("KERNEL_OK")
</pallas_src>

<mosaic_0001>
module attributes {stable_mosaic.version = 11 : i64} {
  func.func @_edge_snn_kernel(%arg0: memref<8x784xf32, #tpu.memory_space<vmem>>, %arg1: memref<784x256xbf16, #tpu.memory_space<vmem>>, %arg2: memref<1x256xf32, #tpu.memory_space<vmem>>, %arg3: memref<256x10xbf16, #tpu.memory_space<vmem>>, %arg4: memref<1x10xf32, #tpu.memory_space<vmem>>, %arg5: memref<8x10xf32, #tpu.memory_space<vmem>>, %arg6: memref<8x10xf32, #tpu.memory_space<vmem>>) attributes {dimension_semantics = [], scalar_prefetch = 0 : i64, scratch_operands = 0 : i64, tpu.core_type = #tpu.core_type<tc>} {
    %c0 = arith.constant 0 : index
    %c0_0 = arith.constant 0 : index
    %0 = vector.load %arg0[%c0, %c0_0] : memref<8x784xf32, #tpu.memory_space<vmem>>, vector<8x784xf32>
    %1 = arith.truncf %0 : vector<8x784xf32> to vector<8x784xbf16>
    %c0_1 = arith.constant 0 : index
    %c0_2 = arith.constant 0 : index
    %2 = vector.load %arg1[%c0_1, %c0_2] : memref<784x256xbf16, #tpu.memory_space<vmem>>, vector<784x256xbf16>
    %cst = arith.constant dense<0.000000e+00> : vector<8x256xf32>
    %3 = tpu.matmul %1, %2, %cst {dimension_numbers = #tpu.dot_dimension_numbers<[1], [0], [0], [1], [0, 0, 1, 1], [], []>} : vector<8x784xbf16>, vector<784x256xbf16>, vector<8x256xf32> -> vector<8x256xf32>
    %c0_3 = arith.constant 0 : index
    %c0_4 = arith.constant 0 : index
    %4 = vector.load %arg2[%c0_3, %c0_4] : memref<1x256xf32, #tpu.memory_space<vmem>>, vector<1x256xf32>
    %5 = vector.broadcast %4 : vector<1x256xf32> to vector<8x256xf32>
    %6 = arith.addf %3, %5 : vector<8x256xf32>
    %cst_5 = arith.constant 5.000000e-01 : f32
    %7 = vector.broadcast %cst_5 : f32 to vector<8x256xf32>
    %8 = arith.cmpf ogt, %6, %7 : vector<8x256xf32>
    %9 = arith.extui %8 : vector<8x256xi1> to vector<8x256xi32>
    %10 = arith.sitofp %9 : vector<8x256xi32> to vector<8x256xf32>
    %11 = arith.truncf %10 : vector<8x256xf32> to vector<8x256xbf16>
    %c0_6 = arith.constant 0 : index
    %c0_7 = arith.constant 0 : index
    %12 = vector.load %arg3[%c0_6, %c0_7] : memref<256x10xbf16, #tpu.memory_space<vmem>>, vector<256x10xbf16>
    %cst_8 = arith.constant dense<0.000000e+00> : vector<8x10xf32>
    %13 = tpu.matmul %11, %12, %cst_8 {dimension_numbers = #tpu.dot_dimension_numbers<[1], [0], [0], [1], [0, 0, 1, 1], [], []>} : vector<8x256xbf16>, vector<256x10xbf16>, vector<8x10xf32> -> vector<8x10xf32>
    %c0_9 = arith.constant 0 : index
    %c0_10 = arith.constant 0 : index
    %14 = vector.load %arg4[%c0_9, %c0_10] : memref<1x10xf32, #tpu.memory_space<vmem>>, vector<1x10xf32>
    %15 = vector.broadcast %14 : vector<1x10xf32> to vector<8x10xf32>
    %16 = arith.addf %13, %15 : vector<8x10xf32>
    %cst_11 = arith.constant 5.000000e-01 : f32
    %17 = vector.broadcast %cst_11 : f32 to vector<8x10xf32>
    %18 = arith.cmpf ogt, %16, %17 : vector<8x10xf32>
    %19 = arith.extui %18 : vector<8x10xi1> to vector<8x10xi32>
    %20 = arith.sitofp %19 : vector<8x10xi32> to vector<8x10xf32>
    %c0_12 = arith.constant 0 : index
    %c0_13 = arith.constant 0 : index
    %21 = vector.load %arg5[%c0_12, %c0_13] : memref<8x10xf32, #tpu.memory_space<vmem>>, vector<8x10xf32>
    tpu.vector_store %arg5[%c0_12, %c0_13], %20 {strides = array<i32>} : memref<8x10xf32, #tpu.memory_space<vmem>>, vector<8x10xf32>,
    %c0_14 = arith.constant 0 : index
    %c0_15 = arith.constant 0 : index
    %22 = vector.load %arg6[%c0_14, %c0_15] : memref<8x10xf32, #tpu.memory_space<vmem>>, vector<8x10xf32>
    tpu.vector_store %arg6[%c0_14, %c0_15], %16 {strides = array<i32>} : memref<8x10xf32, #tpu.memory_space<vmem>>, vector<8x10xf32>,
    return
  }
}

</mosaic_0001>

<llo_original>
// kernel: tpu_custom_call.1
$region0: #{tpu_custom_call.1}
  #allocation0 [shape = 'u32[]', space=smem, size = 0x4, offset = 0x4, fixed_abs, tag = 'smem constant byte address 0x4 - core index']
  #allocation1 [shape = 'u32[144,128]{1,0:T(1,128)}', space=vmem, size = 0x12000, scoped, tag = 'internal scratch']
  %s0 = inlined_call_operand.vmem [shape: f32[8,784], index: 0, kind: input, shape index: {}]
  %s1 = inlined_call_operand.hbm [shape: bf16[784,256], index: 1, kind: input, shape index: {}]
  %s2 = inlined_call_operand.vmem [shape: f32[1,256], index: 2, kind: input, shape index: {}]
  %s3 = inlined_call_operand.vmem [shape: bf16[256,10], index: 3, kind: input, shape index: {}]
  %s4 = inlined_call_operand.vmem [shape: f32[1,10], index: 4, kind: input, shape index: {}]
  %s5 = inlined_call_operand.hbm [shape: f32[8,10], index: 5, kind: output, shape index: {0}]
  %s6 = inlined_call_operand.hbm [shape: f32[8,10], index: 6, kind: output, shape index: {1}]
  %7 = xla_tuple %s5, %s6
  %s8 = sld [smem:[#allocation0]]
  $region42: #{tpu_custom_call.1} parent=0
    _
  %s10 = ssub.s32 1, %s8
  %s11 = scalar_select 0, %s10, %s8
  $region1: #{tpu_custom_call.1} parent=0
    #allocation2 [shape = 'u8[401408]{0}', space=vmem, size = 0x62000, scoped, tag = 'input window, operand 1, single buffered']
    #allocation3 [shape = 's32[1]{0}', space=sflag, size = 0x4, scoped, tag = 'scoped memory for tpu_custom_call.1']
    #allocation4 [shape = 's32[1]{0}', space=sflag, size = 0x4, scoped, tag = 'scoped memory for tpu_custom_call.1']
    #allocation5 [shape = 'u8[4096]{0}', space=vmem, size = 0x1000, scoped, tag = 'output window, operand 0, single buffered']
    #allocation6 [shape = 'u8[4096]{0}', space=vmem, size = 0x1000, scoped, tag = 'output window, operand 1, single buffered']
    #allocation7 [shape = 's32[1]{0}', space=sflag, size = 0x4, scoped, tag = 'scoped memory for tpu_custom_call.1']
    %12 = vsyncpa [#allocation3], 0
    %13 = vsyncpa [#allocation4], 0
    %14 = vsyncpa [#allocation7], 0
    // Predicated region
    $region2: #{tpu_custom_call.1} parent=1 // pred_check
      _
    $region3: #{tpu_custom_call.1} parent=1 // pred_check_branch
      %16 = sbr.rel (0) target = $region5
    $region4: #{tpu_custom_call.1} parent=1 // pred_region
      _
    $region5: #{tpu_custom_call.1} parent=1 // pred_fallthru
      _
    // Predicated region
    $region6: #{tpu_custom_call.1} parent=1 // pred_check
      _
    $region7: #{tpu_custom_call.1} parent=1 // pred_check_branch
      %18 = sbr.rel (0) target = $region9
    $region8: #{tpu_custom_call.1} parent=1 // pred_region
      %s20 = ssub.s32 12544, 12544
      %21 = vsyncadd [#allocation3], %s20
      %s22 = sshll.u32 [#allocation2], 4
      %s23 = int_to_ptr.vmem [resolvable:$true] %s22
      %28 = dma.hbm_to_vmem [thread:$0]  %s1, 12544, %s23, [#allocation3], 128, 128, 8
    $region9: #{tpu_custom_call.1} parent=1 // pred_fallthru
      _
    // Predicated region
    $region10: #{tpu_custom_call.1} parent=1 // pred_check
      _
    $region11: #{tpu_custom_call.1} parent=1 // pred_check_branch
      %30 = sbr.rel (0) target = $region13
    $region12: #{tpu_custom_call.1} parent=1 // pred_region
      _
    $region13: #{tpu_custom_call.1} parent=1 // pred_fallthru
      _
    // Predicated region
    $region14: #{tpu_custom_call.1} parent=1 // pred_check
      _
    $region15: #{tpu_custom_call.1} parent=1 // pred_check_branch
      %32 = sbr.rel (0) target = $region17
    $region16: #{tpu_custom_call.1} parent=1 // pred_region
      _
    $region17: #{tpu_custom_call.1} parent=1 // pred_fallthru
      _
    // Predicated region
    $region18: #{tpu_custom_call.1} parent=1 // pred_check
      _
    $region19: #{tpu_custom_call.1} parent=1 // pred_check_branch
      %34 = sbr.rel (0) target = $region21
    $region20: #{tpu_custom_call.1} parent=1 // pred_region
      _
    $region21: #{tpu_custom_call.1} parent=1 // pred_fallthru
      _
    // Predicated region
    $region22: #{tpu_custom_call.1} parent=1 // pred_check
      _
    $region23: #{tpu_custom_call.1} parent=1 // pred_check_branch
      %36 = sbr.rel (0) target = $region25
    $region24: #{tpu_custom_call.1} parent=1 // pred_region
      %37 = dma.done [#allocation3], 12544
    $region25: #{tpu_custom_call.1} parent=1 // pred_fallthru
      _
    %v39 = vld [vmem:[%s0] sm:$0xff]
    %v40 = vld [vmem:[%s0 + $0x8] sm:$0xff]
    %v41 = vld [vmem:[%s0 + $0x10] sm:$0xff]
    %v42 = vld [vmem:[%s0 + $0x18] sm:$0xff]
    %v43 = vld [vmem:[%s0 + $0x20] sm:$0xff]
    %v44 = vld [vmem:[%s0 + $0x28] sm:$0xff]
    %v45 = vld [vmem:[%s0 + $0x30] sm:$0xff]
    %v46 = vpack.c.bf16 %v39, %v39
    %v47 = vpack.c.bf16 %v40, %v40
    %v48 = vpack.c.bf16 %v41, %v41
    %v49 = vpack.c.bf16 %v42, %v42
    %v50 = vpack.c.bf16 %v43, %v43
    %v51 = vpack.c.bf16 %v44, %v44
    %v52 = vpack.c.bf16 %v45, %v45
    %v53 = vld [vmem:[#allocation2] sm:$0xff]
    %v54 = vld [vmem:[#allocation2 + $0x8] sm:$0xff]
    %v55 = vld [vmem:[#allocation2 + $0x10] sm:$0xff]
    %v56 = vld [vmem:[#allocation2 + $0x18] sm:$0xff]
    %v57 = vld [vmem:[#allocation2 + $0x20] sm:$0xff]
    %v58 = vld [vmem:[#allocation2 + $0x28] sm:$0xff]
    %v59 = vld [vmem:[#allocation2 + $0x30] sm:$0xff]
    %v60 = vld [vmem:[#allocation2 + $0x38] sm:$0xff]
    %v61 = vld [vmem:[#allocation2 + $0x40] sm:$0xff]
    %v62 = vld [vmem:[#allocation2 + $0x48] sm:$0xff]
    %v63 = vld [vmem:[#allocation2 + $0x50] sm:$0xff]
    %v64 = vld [vmem:[#allocation2 + $0x58] sm:$0xff]
    %v65 = vld [vmem:[#allocation2 + $0x60] sm:$0xff]
    %v66 = vld [vmem:[#allocation2 + $0x68] sm:$0xff]
    %v67 = vld [vmem:[#allocation2 + $0x70] sm:$0xff]
    %v68 = vld [vmem:[#allocation2 + $0x78] sm:$0xff]
    %v69 = vld [vmem:[#allocation2 + $0x80] sm:$0xff]
    %v70 = vld [vmem:[#allocation2 + $0x88] sm:$0xff]
    %v71 = vld [vmem:[#allocation2 + $0x90] sm:$0xff]
    %v72 = vld [vmem:[#allocation2 + $0x98] sm:$0xff]
    %v73 = vld [vmem:[#allocation2 + $0xa0] sm:$0xff]
    %v74 = vld [vmem:[#allocation2 + $0xa8] sm:$0xff]
    %v75 = vld [vmem:[#allocation2 + $0xb0] sm:$0xff]
    %v76 = vld [vmem:[#allocation2 + $0xb8] sm:$0xff]
    %v77 = vld [vmem:[#allocation2 + $0xc0] sm:$0xff]
    %v78 = vld [vmem:[#allocation2 + $0xc8] sm:$0xff]
    %v79 = vld [vmem:[#allocation2 + $0xd0] sm:$0xff]
    %v80 = vld [vmem:[#allocation2 + $0xd8] sm:$0xff]
    %v81 = vld [vmem:[#allocation2 + $0xe0] sm:$0xff]
    %v82 = vld [vmem:[#allocation2 + $0xe8] sm:$0xff]
    %v83 = vld [vmem:[#allocation2 + $0xf0] sm:$0xff]
    %v84 = vld [vmem:[#allocation2 + $0xf8] sm:$0xff]
    %v85 = vld [vmem:[#allocation2 + $0x100] sm:$0xff]
    %v86 = vld [vmem:[#allocation2 + $0x108] sm:$0xff]
    %v87 = vld [vmem:[#allocation2 + $0x110] sm:$0xff]
    %v88 = vld [vmem:[#allocation2 + $0x118] sm:$0xff]
    %v89 = vld [vmem:[#allocation2 + $0x120] sm:$0xff]
    %v90 = vld [vmem:[#allocation2 + $0x128] sm:$0xff]
    %v91 = vld [vmem:[#allocation2 + $0x130] sm:$0xff]
    %v92 = vld [vmem:[#allocation2 + $0x138] sm:$0xff]
    %v93 = vld [vmem:[#allocation2 + $0x140] sm:$0xff]
    %v94 = vld [vmem:[#allocation2 + $0x148] sm:$0xff]
    %v95 = vld [vmem:[#allocation2 + $0x150] sm:$0xff]
    %v96 = vld [vmem:[#allocation2 + $0x158] sm:$0xff]
    %v97 = vld [vmem:[#allocation2 + $0x160] sm:$0xff]
    %v98 = vld [vmem:[#allocation2 + $0x168] sm:$0xff]
    %v99 = vld [vmem:[#allocation2 + $0x170] sm:$0xff]
    %v100 = vld [vmem:[#allocation2 + $0x178] sm:$0xff]
    %v101 = vld [vmem:[#allocation2 + $0x180] sm:$0xff]
    %v102 = vld [vmem:[#allocation2 + $0x188] sm:$0xff]
    %v103 = vld [vmem:[#allocation2 + $0x190] sm:$0xff]
    %v104 = vld [vmem:[#allocation2 + $0x198] sm:$0xff]
    %v105 = vld [vmem:[#allocation2 + $0x1a0] sm:$0xff]
    %v106 = vld [vmem:[#allocation2 + $0x1a8] sm:$0xff]
    %v107 = vld [vmem:[#allocation2 + $0x1b0] sm:$0xff]
    %v108 = vld [vmem:[#allocation2 + $0x1b8] sm:$0xff]
    %v109 = vld [vmem:[#allocation2 + $0x1c0] sm:$0xff]
    %v110 = vld [vmem:[#allocation2 + $0x1c8] sm:$0xff]
    %v111 = vld [vmem:[#allocation2 + $0x1d0] sm:$0xff]
    %v112 = vld [vmem:[#allocation2 + $0x1d8] sm:$0xff]
    %v113 = vld [vmem:[#allocation2 + $0x1e0] sm:$0xff]
    %v114 = vld [vmem:[#allocation2 + $0x1e8] sm:$0xff]
    %v115 = vld [vmem:[#allocation2 + $0x1f0] sm:$0xff]
    %v116 = vld [vmem:[#allocation2 + $0x1f8] sm:$0xff]
    %v117 = vld [vmem:[#allocation2 + $0x200] sm:$0xff]
    %v118 = vld [vmem:[#allocation2 + $0x208] sm:$0xff]
    %v119 = vld [vmem:[#allocation2 + $0x210] sm:$0xff]
    %v120 = vld [vmem:[#allocation2 + $0x218] sm:$0xff]
    %v121 = vld [vmem:[#allocation2 + $0x220] sm:$0xff]
    %v122 = vld [vmem:[#allocation2 + $0x228] sm:$0xff]
    %v123 = vld [vmem:[#allocation2 + $0x230] sm:$0xff]
    %v124 = vld [vmem:[#allocation2 + $0x238] sm:$0xff]
    %v125 = vld [vmem:[#allocation2 + $0x240] sm:$0xff]
    %v126 = vld [vmem:[#allocation2 + $0x248] sm:$0xff]
    %v127 = vld [vmem:[#allocation2 + $0x250] sm:$0xff]
    %v128 = vld [vmem:[#allocation2 + $0x258] sm:$0xff]
    %v129 = vld [vmem:[#allocation2 + $0x260] sm:$0xff]
    %v130 = vld [vmem:[#allocation2 + $0x268] sm:$0xff]
    %v131 = vld [vmem:[#allocation2 + $0x270] sm:$0xff]
    %v132 = vld [vmem:[#allocation2 + $0x278] sm:$0xff]
    %v133 = vld [vmem:[#allocation2 + $0x280] sm:$0xff]
    %v134 = vld [vmem:[#allocation2 + $0x288] sm:$0xff]
    %v135 = vld [vmem:[#allocation2 + $0x290] sm:$0xff]
    %v136 = vld [vmem:[#allocation2 + $0x298] sm:$0xff]
    %v137 = vld [vmem:[#allocation2 + $0x2a0] sm:$0xff]
    %v138 = vld [vmem:[#allocation2 + $0x2a8] sm:$0xff]
    %v139 = vld [vmem:[#allocation2 + $0x2b0] sm:$0xff]
    %v140 = vld [vmem:[#allocation2 + $0x2b8] sm:$0xff]
    %v141 = vld [vmem:[#allocation2 + $0x2c0] sm:$0xff]
    %v142 = vld [vmem:[#allocation2 + $0x2c8] sm:$0xff]
    %v143 = vld [vmem:[#allocation2 + $0x2d0] sm:$0xff]
    %v144 = vld [vmem:[#allocation2 + $0x2d8] sm:$0xff]
    %v145 = vld [vmem:[#allocation2 + $0x2e0] sm:$0xff]
    %v146 = vld [vmem:[#allocation2 + $0x2e8] sm:$0xff]
    %v147 = vld [vmem:[#allocation2 + $0x2f0] sm:$0xff]
    %v148 = vld [vmem:[#allocation2 + $0x2f8] sm:$0xff]
    %v149 = vld [vmem:[#allocation2 + $0x300] sm:$0xff]
    %v150 = vld [vmem:[#allocation2 + $0x308] sm:$0xff]
    %v151 = vld [vmem:[%s2] sm:$0x3]
    %v153 = vlaneseq
    %v154 = vshrl.u32 %v153, 7
    %v155 = vsub.s32 0, %v154
    %v156 = vrot.slane %v151, %v155
    %v157 = vlaneseq
    %v158 = vshrl.u32 %v157, 7
    %v159 = vsub.s32 1, %v158
    %v160 = vrot.slane %v151, %v159
    %v261 = vunpack.c.l.b16 %v53
    %v262 = vunpack.c.h.b16 %v53
    %v263 = vunpack.c.l.b16 %v54
    %v264 = vunpack.c.h.b16 %v54
    %v265 = vunpack.c.l.b16 %v55
    %v266 = vunpack.c.h.b16 %v55
    %v267 = vunpack.c.l.b16 %v56
    %v268 = vunpack.c.h.b16 %v56
    %v269 = vunpack.c.l.b16 %v57
    %v270 = vunpack.c.h.b16 %v57
    %v271 = vunpack.c.l.b16 %v58
    %v272 = vunpack.c.h.b16 %v58
    %v273 = vunpack.c.l.b16 %v59
    %v274 = vunpack.c.h.b16 %v59
    %v275 = vunpack.c.l.b16 %v60
    %v276 = vunpack.c.h.b16 %v60
    %v277 = vunpack.c.l.b16 %v61
    %v278 = vunpack.c.h.b16 %v61
    %v279 = vunpack.c.l.b16 %v62
    %v280 = vunpack.c.h.b16 %v62
    %v281 = vunpack.c.l.b16 %v63
    %v282 = vunpack.c.h.b16 %v63
    %v283 = vunpack.c.l.b16 %v64
    %v284 = vunpack.c.h.b16 %v64
    %v285 = vunpack.c.l.b16 %v65
    %v286 = vunpack.c.h.b16 %v65
    %v287 = vunpack.c.l.b16 %v66
    %v288 = vunpack.c.h.b16 %v66
    %v289 = vunpack.c.l.b16 %v67
    %v290 = vunpack.c.h.b16 %v67
    %v291 = vunpack.c.l.b16 %v68
    %v292 = vunpack.c.h.b16 %v68
    %v293 = vunpack.c.l.b16 %v69
    %v294 = vunpack.c.h.b16 %v69
    %v295 = vunpack.c.l.b16 %v70
    %v296 = vunpack.c.h.b16 %v70
    %v297 = vunpack.c.l.b16 %v71
    %v298 = vunpack.c.h.b16 %v71
    %v299 = vunpack.c.l.b16 %v72
    %v300 = vunpack.c.h.b16 %v72
    %v301 = vunpack.c.l.b16 %v73
    %v302 = vunpack.c.h.b16 %v73
    %v303 = vunpack.c.l.b16 %v74
    %v304 = vunpack.c.h.b16 %v74
    %v305 = vunpack.c.l.b16 %v75
    %v306 = vunpack.c.h.b16 %v75
    %v307 = vunpack.c.l.b16 %v76
    %v308 = vunpack.c.h.b16 %v76
    %v309 = vunpack.c.l.b16 %v77
    %v310 = vunpack.c.h.b16 %v77
    %v311 = vunpack.c.l.b16 %v78
    %v312 = vunpack.c.h.b16 %v78
    %v313 = vunpack.c.l.b16 %v79
    %v314 = vunpack.c.h.b16 %v79
    %v315 = vunpack.c.l.b16 %v80
    %v316 = vunpack.c.h.b16 %v80
    %v317 = vunpack.c.l.b16 %v81
    %v318 = vunpack.c.h.b16 %v81
    %v319 = vunpack.c.l.b16 %v82
    %v320 = vunpack.c.h.b16 %v82
    %v321 = vunpack.c.l.b16 %v83
    %v322 = vunpack.c.h.b16 %v83
    %v323 = vunpack.c.l.b16 %v84
    %v324 = vunpack.c.h.b16 %v84
    %v325 = vunpack.c.l.b16 %v85
    %v326 = vunpack.c.h.b16 %v85
    %v327 = vunpack.c.l.b16 %v86
    %v328 = vunpack.c.h.b16 %v86
    %v329 = vunpack.c.l.b16 %v87
    %v330 = vunpack.c.h.b16 %v87
    %v331 = vunpack.c.l.b16 %v88
    %v332 = vunpack.c.h.b16 %v88
    %v333 = vunpack.c.l.b16 %v89
    %v334 = vunpack.c.h.b16 %v89
    %v335 = vunpack.c.l.b16 %v90
    %v336 = vunpack.c.h.b16 %v90
    %v337 = vunpack.c.l.b16 %v91
    %v338 = vunpack.c.h.b16 %v91
    %v339 = vunpack.c.l.b16 %v92
    %v340 = vunpack.c.h.b16 %v92
    %v341 = vunpack.c.l.b16 %v93
    %v342 = vunpack.c.h.b16 %v93
    %v343 = vunpack.c.l.b16 %v94
    %v344 = vunpack.c.h.b16 %v94
    %v345 = vunpack.c.l.b16 %v95
    %v346 = vunpack.c.h.b16 %v95
    %v347 = vunpack.c.l.b16 %v96
    %v348 = vunpack.c.h.b16 %v96
    %v349 = vunpack.c.l.b16 %v97
    %v350 = vunpack.c.h.b16 %v97
    %v351 = vunpack.c.l.b16 %v98
    %v352 = vunpack.c.h.b16 %v98
    %v353 = vunpack.c.l.b16 %v99
    %v354 = vunpack.c.h.b16 %v99
    %v355 = vunpack.c.l.b16 %v100
    %v356 = vunpack.c.h.b16 %v100
    %v357 = vunpack.c.l.b16 %v101
    %v358 = vunpack.c.h.b16 %v101
    %v359 = vunpack.c.l.b16 %v102
    %v360 = vunpack.c.h.b16 %v102
    %v361 = vunpack.c.l.b16 %v103
    %v362 = vunpack.c.h.b16 %v103
    %v363 = vunpack.c.l.b16 %v104
    %v364 = vunpack.c.h.b16 %v104
    %v365 = vunpack.c.l.b16 %v105
    %v366 = vunpack.c.h.b16 %v105
    %v367 = vunpack.c.l.b16 %v106
    %v368 = vunpack.c.h.b16 %v106
    %v369 = vunpack.c.l.b16 %v107
    %v370 = vunpack.c.h.b16 %v107
    %v371 = vunpack.c.l.b16 %v108
    %v372 = vunpack.c.h.b16 %v108
    %v373 = vunpack.c.l.b16 %v109
    %v374 = vunpack.c.h.b16 %v109
    %v375 = vunpack.c.l.b16 %v110
    %v376 = vunpack.c.h.b16 %v110
    %v377 = vunpack.c.l.b16 %v111
    %v378 = vunpack.c.h.b16 %v111
    %v379 = vunpack.c.l.b16 %v112
    %v380 = vunpack.c.h.b16 %v112
    %v381 = vunpack.c.l.b16 %v113
    %v382 = vunpack.c.h.b16 %v113
    %v383 = vunpack.c.l.b16 %v114
    %v384 = vunpack.c.h.b16 %v114
    %v385 = vunpack.c.l.b16 %v115
    %v386 = vunpack.c.h.b16 %v115
    %v387 = vunpack.c.l.b16 %v116
    %v388 = vunpack.c.h.b16 %v116
    %v389 = vunpack.c.l.b16 %v117
    %v390 = vunpack.c.h.b16 %v117
    %v391 = vunpack.c.l.b16 %v118
    %v392 = vunpack.c.h.b16 %v118
    %v393 = vunpack.c.l.b16 %v119
    %v394 = vunpack.c.h.b16 %v119
    %v395 = vunpack.c.l.b16 %v120
    %v396 = vunpack.c.h.b16 %v120
    %v397 = vunpack.c.l.b16 %v121
    %v398 = vunpack.c.h.b16 %v121
    %v399 = vunpack.c.l.b16 %v122
    %v400 = vunpack.c.h.b16 %v122
    %v401 = vunpack.c.l.b16 %v123
    %v402 = vunpack.c.h.b16 %v123
    %v403 = vunpack.c.l.b16 %v124
    %v404 = vunpack.c.h.b16 %v124
    %v405 = vunpack.c.l.b16 %v125
    %v406 = vunpack.c.h.b16 %v125
    %v407 = vunpack.c.l.b16 %v126
    %v408 = vunpack.c.h.b16 %v126
    %v409 = vunpack.c.l.b16 %v127
    %v410 = vunpack.c.h.b16 %v127
    %v411 = vunpack.c.l.b16 %v128
    %v412 = vunpack.c.h.b16 %v128
    %v413 = vunpack.c.l.b16 %v129
    %v414 = vunpack.c.h.b16 %v129
    %v415 = vunpack.c.l.b16 %v130
    %v416 = vunpack.c.h.b16 %v130
    %v417 = vunpack.c.l.b16 %v131
    %v418 = vunpack.c.h.b16 %v131
    %v419 = vunpack.c.l.b16 %v132
    %v420 = vunpack.c.h.b16 %v132
    %v421 = vunpack.c.l.b16 %v133
    %v422 = vunpack.c.h.b16 %v133
    %v423 = vunpack.c.l.b16 %v134
    %v424 = vunpack.c.h.b16 %v134
    %v425 = vunpack.c.l.b16 %v135
    %v426 = vunpack.c.h.b16 %v135
    %v427 = vunpack.c.l.b16 %v136
    %v428 = vunpack.c.h.b16 %v136
    %v429 = vunpack.c.l.b16 %v137
    %v430 = vunpack.c.h.b16 %v137
    %v431 = vunpack.c.l.b16 %v138
    %v432 = vunpack.c.h.b16 %v138
    %v433 = vunpack.c.l.b16 %v139
    %v434 = vunpack.c.h.b16 %v139
    %v435 = vunpack.c.l.b16 %v140
    %v436 = vunpack.c.h.b16 %v140
    %v437 = vunpack.c.l.b16 %v141
    %v438 = vunpack.c.h.b16 %v141
    %v439 = vunpack.c.l.b16 %v142
    %v440 = vunpack.c.h.b16 %v142
    %v441 = vunpack.c.l.b16 %v143
    %v442 = vunpack.c.h.b16 %v143
    %v443 = vunpack.c.l.b16 %v144
    %v444 = vunpack.c.h.b16 %v144
    %v445 = vunpack.c.l.b16 %v145
    %v446 = vunpack.c.h.b16 %v145
    %v447 = vunpack.c.l.b16 %v146
    %v448 = vunpack.c.h.b16 %v146
    %v449 = vunpack.c.l.b16 %v147
    %v450 = vunpack.c.h.b16 %v147
    %v451 = vunpack.c.l.b16 %v148
    %v452 = vunpack.c.h.b16 %v148
    %v453 = vunpack.c.l.b16 %v149
    %v454 = vunpack.c.h.b16 %v149
    %v455 = vunpack.c.l.b16 %v150
    %v456 = vunpack.c.h.b16 %v150
    %v457 = vpack.c.b16 %v263, %v261
    %v458 = vpack.c.b16 %v264, %v262
    %v459 = vpack.c.b16 %v267, %v265
    %v460 = vpack.c.b16 %v268, %v266
    %v461 = vpack.c.b16 %v271, %v269
    %v462 = vpack.c.b16 %v272, %v270
    %v463 = vpack.c.b16 %v275, %v273
    %v464 = vpack.c.b16 %v276, %v274
    %v465 = vpack.c.b16 %v279, %v277
    %v466 = vpack.c.b16 %v280, %v278
    %v467 = vpack.c.b16 %v283, %v281
    %v468 = vpack.c.b16 %v284, %v282
    %v469 = vpack.c.b16 %v287, %v285
    %v470 = vpack.c.b16 %v288, %v286
    %v471 = vpack.c.b16 %v291, %v289
    %v472 = vpack.c.b16 %v292, %v290
    %v473 = vpack.c.b16 %v295, %v293
    %v474 = vpack.c.b16 %v296, %v294
    %v475 = vpack.c.b16 %v299, %v297
    %v476 = vpack.c.b16 %v300, %v298
    %v477 = vpack.c.b16 %v303, %v301
    %v478 = vpack.c.b16 %v304, %v302
    %v479 = vpack.c.b16 %v307, %v305
    %v480 = vpack.c.b16 %v308, %v306
    %v481 = vpack.c.b16 %v311, %v309
    %v482 = vpack.c.b16 %v312, %v310
    %v483 = vpack.c.b16 %v315, %v313
    %v484 = vpack.c.b16 %v316, %v314
    %v485 = vpack.c.b16 %v319, %v317
    %v486 = vpack.c.b16 %v320, %v318
    %v487 = vpack.c.b16 %v323, %v321
    %v488 = vpack.c.b16 %v324, %v322
    %v489 = vpack.c.b16 %v327, %v325
    %v490 = vpack.c.b16 %v328, %v326
    %v491 = vpack.c.b16 %v331, %v329
    %v492 = vpack.c.b16 %v332, %v330
    %v493 = vpack.c.b16 %v335, %v333
    %v494 = vpack.c.b16 %v336, %v334
    %v495 = vpack.c.b16 %v339, %v337
    %v496 = vpack.c.b16 %v340, %v338
    %v497 = vpack.c.b16 %v343, %v341
    %v498 = vpack.c.b16 %v344, %v342
    %v499 = vpack.c.b16 %v347, %v345
    %v500 = vpack.c.b16 %v348, %v346
    %v501 = vpack.c.b16 %v351, %v349
    %v502 = vpack.c.b16 %v352, %v350
    %v503 = vpack.c.b16 %v355, %v353
    %v504 = vpack.c.b16 %v356, %v354
    %v505 = vpack.c.b16 %v359, %v357
    %v506 = vpack.c.b16 %v360, %v358
    %v507 = vpack.c.b16 %v363, %v361
    %v508 = vpack.c.b16 %v364, %v362
    %v509 = vpack.c.b16 %v367, %v365
    %v510 = vpack.c.b16 %v368, %v366
    %v511 = vpack.c.b16 %v371, %v369
    %v512 = vpack.c.b16 %v372, %v370
    %v513 = vpack.c.b16 %v375, %v373
    %v514 = vpack.c.b16 %v376, %v374
    %v515 = vpack.c.b16 %v379, %v377
    %v516 = vpack.c.b16 %v380, %v378
    %v517 = vpack.c.b16 %v383, %v381
    %v518 = vpack.c.b16 %v384, %v382
    %v519 = vpack.c.b16 %v387, %v385
    %v520 = vpack.c.b16 %v388, %v386
    %v521 = vpack.c.b16 %v391, %v389
    %v522 = vpack.c.b16 %v392, %v390
    %v523 = vpack.c.b16 %v395, %v393
    %v524 = vpack.c.b16 %v396, %v394
    %v525 = vpack.c.b16 %v399, %v397
    %v526 = vpack.c.b16 %v400, %v398
    %v527 = vpack.c.b16 %v403, %v401
    %v528 = vpack.c.b16 %v404, %v402
    %v529 = vpack.c.b16 %v407, %v405
    %v530 = vpack.c.b16 %v408, %v406
    %v531 = vpack.c.b16 %v411, %v409
    %v532 = vpack.c.b16 %v412, %v410
    %v533 = vpack.c.b16 %v415, %v413
    %v534 = vpack.c.b16 %v416, %v414
    %v535 = vpack.c.b16 %v419, %v417
    %v536 = vpack.c.b16 %v420, %v418
    %v537 = vpack.c.b16 %v423, %v421
    %v538 = vpack.c.b16 %v424, %v422
    %v539 = vpack.c.b16 %v427, %v425
    %v540 = vpack.c.b16 %v428, %v426
    %v541 = vpack.c.b16 %v431, %v429
    %v542 = vpack.c.b16 %v432, %v430
    %v543 = vpack.c.b16 %v435, %v433
    %v544 = vpack.c.b16 %v436, %v434
    %v545 = vpack.c.b16 %v439, %v437
    %v546 = vpack.c.b16 %v440, %v438
    %v547 = vpack.c.b16 %v443, %v441
    %v548 = vpack.c.b16 %v444, %v442
    %v549 = vpack.c.b16 %v447, %v445
    %v550 = vpack.c.b16 %v448, %v446
    %v551 = vpack.c.b16 %v451, %v449
    %v552 = vpack.c.b16 %v452, %v450
    %v553 = vpack.c.b16 %v455, %v453
    %v554 = vpack.c.b16 %v456, %v454
    %vm653 = vcmask 130048
    %v655 = vsel %vm653, %v52, 0
    %657 = vmatprep.subr.bf16.mxu0 %v458
    %658 = vmatpush1.bf16.msra.mxu0 %v457
    %659 = vmatprep.subr.bf16.mxu0 %v460
    %660 = vmatpush1.bf16.msra.mxu0 %v459
    %661 = vmatprep.subr.bf16.mxu0 %v462
    %662 = vmatpush1.bf16.msra.mxu0 %v461
    %663 = vmatprep.subr.bf16.mxu0 %v464
    %664 = vmatpush1.bf16.msra.mxu0 %v463
    %665 = vmatprep.subr.bf16.mxu0 %v466
    %666 = vmatpush1.bf16.msra.mxu0 %v465
    %667 = vmatprep.subr.bf16.mxu0 %v468
    %668 = vmatpush1.bf16.msra.mxu0 %v467
    %669 = vmatprep.subr.bf16.mxu0 %v470
    %670 = vmatpush1.bf16.msra.mxu0 %v469
    %671 = vmatprep.subr.bf16.mxu0 %v472
    %672 = vmatpush1.bf16.msra.mxu0 %v471
    %673 = vmatprep.subr.bf16.mxu0 %v474
    %674 = vmatpush1.bf16.msra.mxu0 %v473
    %675 = vmatprep.subr.bf16.mxu0 %v476
    %676 = vmatpush1.bf16.msra.mxu0 %v475
    %677 = vmatprep.subr.bf16.mxu0 %v478
    %678 = vmatpush1.bf16.msra.mxu0 %v477
    %679 = vmatprep.subr.bf16.mxu0 %v480
    %680 = vmatpush1.bf16.msra.mxu0 %v479
    %681 = vmatprep.subr.bf16.mxu0 %v482
    %682 = vmatpush1.bf16.msra.mxu0 %v481
    %683 = vmatprep.subr.bf16.mxu0 %v484
    %684 = vmatpush1.bf16.msra.mxu0 %v483
    %685 = vmatprep.subr.bf16.mxu0 %v486
    %686 = vmatpush1.bf16.msra.mxu0 %v485
    %687 = vmatprep.subr.bf16.mxu0 %v488
    %688 = vmatpush1.bf16.msra.mxu0 %v487
    %689 = vmatprep.mubr.bf16.mxu0 %v47
    %690 = vmatmul.mubr.bf16.gmra.mrb[0].mxu0 %v46
    %v691 = vpop.f32.mrb[0].mxu0
    %v692 = vadd.f32 %v156, %v691
    %v693 = vpop.f32.mrb[0].mxu0
    %v694 = vadd.f32 %v160, %v693
    %v695 = vpop.f32.mrb[0].mxu0
    %v696 = vpop.f32.mrb[0].mxu0
    %697 = vdwg.mxu0
    %698 = vmatprep.subr.bf16.mxu0 %v490
    %699 = vmatpush1.bf16.msra.mxu0 %v489
    %700 = vmatprep.subr.bf16.mxu0 %v492
    %701 = vmatpush1.bf16.msra.mxu0 %v491
    %702 = vmatprep.subr.bf16.mxu0 %v494
    %703 = vmatpush1.bf16.msra.mxu0 %v493
    %704 = vmatprep.subr.bf16.mxu0 %v496
    %705 = vmatpush1.bf16.msra.mxu0 %v495
    %706 = vmatprep.subr.bf16.mxu0 %v498
    %707 = vmatpush1.bf16.msra.mxu0 %v497
    %708 = vmatprep.subr.bf16.mxu0 %v500
    %709 = vmatpush1.bf16.msra.mxu0 %v499
    %710 = vmatprep.subr.bf16.mxu0 %v502
    %711 = vmatpush1.bf16.msra.mxu0 %v501
    %712 = vmatprep.subr.bf16.mxu0 %v504
    %713 = vmatpush1.bf16.msra.mxu0 %v503
    %714 = vmatprep.subr.bf16.mxu0 %v506
    %715 = vmatpush1.bf16.msra.mxu0 %v505
    %716 = vmatprep.subr.bf16.mxu0 %v508
    %717 = vmatpush1.bf16.msra.mxu0 %v507
    %718 = vmatprep.subr.bf16.mxu0 %v510
    %719 = vmatpush1.bf16.msra.mxu0 %v509
    %720 = vmatprep.subr.bf16.mxu0 %v512
    %721 = vmatpush1.bf16.msra.mxu0 %v511
    %722 = vmatprep.subr.bf16.mxu0 %v514
    %723 = vmatpush1.bf16.msra.mxu0 %v513
    %724 = vmatprep.subr.bf16.mxu0 %v516
    %725 = vmatpush1.bf16.msra.mxu0 %v515
    %726 = vmatprep.subr.bf16.mxu0 %v518
    %727 = vmatpush1.bf16.msra.mxu0 %v517
    %728 = vmatprep.subr.bf16.mxu0 %v520
    %729 = vmatpush1.bf16.msra.mxu0 %v519
    %730 = vmatprep.mubr.bf16.mxu0 %v49
    %731 = vmatmul.mubr.bf16.gmra.mrb[0].mxu0 %v48
    %v732 = vpop.f32.mrb[0].mxu0
    %v733 = vadd.f32 %v692, %v732
    %v734 = vpop.f32.mrb[0].mxu0
    %v735 = vadd.f32 %v694, %v734
    %v736 = vpop.f32.mrb[0].mxu0
    %v737 = vpop.f32.mrb[0].mxu0
    %738 = vdwg.mxu0
    %739 = vmatprep.subr.bf16.mxu0 %v522
    %740 = vmatpush1.bf16.msra.mxu0 %v521
    %741 = vmatprep.subr.bf16.mxu0 %v524
    %742 = vmatpush1.bf16.msra.mxu0 %v523
    %743 = vmatprep.subr.bf16.mxu0 %v526
    %744 = vmatpush1.bf16.msra.mxu0 %v525
    %745 = vmatprep.subr.bf16.mxu0 %v528
    %746 = vmatpush1.bf16.msra.mxu0 %v527
    %747 = vmatprep.subr.bf16.mxu0 %v530
    %748 = vmatpush1.bf16.msra.mxu0 %v529
    %749 = vmatprep.subr.bf16.mxu0 %v532
    %750 = vmatpush1.bf16.msra.mxu0 %v531
    %751 = vmatprep.subr.bf16.mxu0 %v534
    %752 = vmatpush1.bf16.msra.mxu0 %v533
    %753 = vmatprep.subr.bf16.mxu0 %v536
    %754 = vmatpush1.bf16.msra.mxu0 %v535
    %755 = vmatprep.subr.bf16.mxu0 %v538
    %756 = vmatpush1.bf16.msra.mxu0 %v537
    %757 = vmatprep.subr.bf16.mxu0 %v540
    %758 = vmatpush1.bf16.msra.mxu0 %v539
    %759 = vmatprep.subr.bf16.mxu0 %v542
    %760 = vmatpush1.bf16.msra.mxu0 %v541
    %761 = vmatprep.subr.bf16.mxu0 %v544
    %762 = vmatpush1.bf16.msra.mxu0 %v543
    %763 = vmatprep.subr.bf16.mxu0 %v546
    %764 = vmatpush1.bf16.msra.mxu0 %v545
    %765 = vmatprep.subr.bf16.mxu0 %v548
    %766 = vmatpush1.bf16.msra.mxu0 %v547
    %767 = vmatprep.subr.bf16.mxu0 %v550
    %768 = vmatpush1.bf16.msra.mxu0 %v549
    %769 = vmatprep.subr.bf16.mxu0 %v552
    %770 = vmatpush1.bf16.msra.mxu0 %v551
    %771 = vmatprep.mubr.bf16.mxu0 %v51
    %772 = vmatmul.mubr.bf16.gmra.mrb[0].mxu0 %v50
    %v773 = vpop.f32.mrb[0].mxu0
    %v774 = vadd.f32 %v733, %v773
    %v775 = vpop.f32.mrb[0].mxu0
    %v776 = vadd.f32 %v735, %v775
    %v777 = vpop.f32.mrb[0].mxu0
    %v778 = vpop.f32.mrb[0].mxu0
    %779 = vdwg.mxu0
    %780 = vmatprep.subr.bf16.mxu0 %v554
    %781 = vmatpush1.bf16.msra.mxu0 %v553
    %782 = vmatprep.subr.bf16.mxu0 0
    %783 = vmatpush1.bf16.msra.mxu0 0
    %784 = vmatprep.subr.bf16.mxu0 0
    %785 = vmatpush1.bf16.msra.mxu0 0
    %786 = vmatprep.subr.bf16.mxu0 0
    %787 = vmatpush1.bf16.msra.mxu0 0
    %788 = vmatprep.subr.bf16.mxu0 0
    %789 = vmatpush1.bf16.msra.mxu0 0
    %790 = vmatprep.subr.bf16.mxu0 0
    %791 = vmatpush1.bf16.msra.mxu0 0
    %792 = vmatprep.subr.bf16.mxu0 0
    %793 = vmatpush1.bf16.msra.mxu0 0
    %794 = vmatprep.subr.bf16.mxu0 0
    %795 = vmatpush1.bf16.msra.mxu0 0
    %796 = vmatprep.subr.bf16.mxu0 0
    %797 = vmatpush1.bf16.msra.mxu0 0
    %798 = vmatprep.subr.bf16.mxu0 0
    %799 = vmatpush1.bf16.msra.mxu0 0
    %800 = vmatprep.subr.bf16.mxu0 0
    %801 = vmatpush1.bf16.msra.mxu0 0
    %802 = vmatprep.subr.bf16.mxu0 0
    %803 = vmatpush1.bf16.msra.mxu0 0
    %804 = vmatprep.subr.bf16.mxu0 0
    %805 = vmatpush1.bf16.msra.mxu0 0
    %806 = vmatprep.subr.bf16.mxu0 0
    %807 = vmatpush1.bf16.msra.mxu0 0
    %808 = vmatprep.subr.bf16.mxu0 0
    %809 = vmatpush1.bf16.msra.mxu0 0
    %810 = vmatprep.subr.bf16.mxu0 0
    %811 = vmatpush1.bf16.msra.mxu0 0
    %812 = vmatprep.mubr.bf16.mxu0 0
    %813 = vmatmul.mubr.bf16.gmra.mrb[0].mxu0 %v655
    %v814 = vpop.f32.mrb[0].mxu0
    %v815 = vadd.f32 %v774, %v814
    %v816 = vpop.f32.mrb[0].mxu0
    %v817 = vadd.f32 %v776, %v816
    %v818 = vpop.f32.mrb[0].mxu0
    %v819 = vpop.f32.mrb[0].mxu0
    %820 = vdwg.mxu0
    %vm821 = vcmp.gt.f32.partialorder %v815, 0.5
    %vm822 = vcmp.gt.f32.partialorder %v817, 0.5
    %v823 = vsel %vm821, 1, 0
    %v824 = vsel %vm822, 1, 0
    %v825 = vcvt.s32.f32 %v823
    %v826 = vcvt.s32.f32 %v824
    %v827 = vpack.c.bf16 %v825, %v825
    %v828 = vpack.c.bf16 %v826, %v826
    %v829 = vld [vmem:[%s3] sm:$0xf]
    %v830 = vld [vmem:[%s3 + $0x4] sm:$0xf]
    %v831 = vld [vmem:[%s3 + $0x8] sm:$0xf]
    %v832 = vld [vmem:[%s3 + $0xc] sm:$0xf]
    %v833 = vld [vmem:[%s3 + $0x10] sm:$0xf]
    %v834 = vld [vmem:[%s3 + $0x14] sm:$0xf]
    %v835 = vld [vmem:[%s3 + $0x18] sm:$0xf]
    %v836 = vld [vmem:[%s3 + $0x1c] sm:$0xf]
    %v837 = vld [vmem:[%s3 + $0x20] sm:$0xf]
    %v838 = vld [vmem:[%s3 + $0x24] sm:$0xf]
    %v839 = vld [vmem:[%s3 + $0x28] sm:$0xf]
    %v840 = vld [vmem:[%s3 + $0x2c] sm:$0xf]
    %v841 = vld [vmem:[%s3 + $0x30] sm:$0xf]
    %v842 = vld [vmem:[%s3 + $0x34] sm:$0xf]
    %v843 = vld [vmem:[%s3 + $0x38] sm:$0xf]
    %v844 = vld [vmem:[%s3 + $0x3c] sm:$0xf]
    %v845 = vld [vmem:[%s3 + $0x40] sm:$0xf]
    %v846 = vld [vmem:[%s3 + $0x44] sm:$0xf]
    %v847 = vld [vmem:[%s3 + $0x48] sm:$0xf]
    %v848 = vld [vmem:[%s3 + $0x4c] sm:$0xf]
    %v849 = vld [vmem:[%s3 + $0x50] sm:$0xf]
    %v850 = vld [vmem:[%s3 + $0x54] sm:$0xf]
    %v851 = vld [vmem:[%s3 + $0x58] sm:$0xf]
    %v852 = vld [vmem:[%s3 + $0x5c] sm:$0xf]
    %v853 = vld [vmem:[%s3 + $0x60] sm:$0xf]
    %v854 = vld [vmem:[%s3 + $0x64] sm:$0xf]
    %v855 = vld [vmem:[%s3 + $0x68] sm:$0xf]
    %v856 = vld [vmem:[%s3 + $0x6c] sm:$0xf]
    %v857 = vld [vmem:[%s3 + $0x70] sm:$0xf]
    %v858 = vld [vmem:[%s3 + $0x74] sm:$0xf]
    %v859 = vld [vmem:[%s3 + $0x78] sm:$0xf]
    %v860 = vld [vmem:[%s3 + $0x7c] sm:$0xf]
    %v861 = vld [vmem:[%s4] sm:$0x1]
    %v863 = vlaneseq
    %v864 = vshrl.u32 %v863, 7
    %v865 = vsub.s32 0, %v864
    %v866 = vrot.slane %v861, %v865
    %v900 = vunpack.c.l.b16 %v829
    %v901 = vunpack.c.l.b16 %v830
    %v902 = vunpack.c.l.b16 %v831
    %v903 = vunpack.c.l.b16 %v832
    %v904 = vunpack.c.l.b16 %v833
    %v905 = vunpack.c.l.b16 %v834
    %v906 = vunpack.c.l.b16 %v835
    %v907 = vunpack.c.l.b16 %v836
    %v908 = vunpack.c.l.b16 %v837
    %v909 = vunpack.c.l.b16 %v838
    %v910 = vunpack.c.l.b16 %v839
    %v911 = vunpack.c.l.b16 %v840
    %v912 = vunpack.c.l.b16 %v841
    %v913 = vunpack.c.l.b16 %v842
    %v914 = vunpack.c.l.b16 %v843
    %v915 = vunpack.c.l.b16 %v844
    %v916 = vunpack.c.l.b16 %v845
    %v917 = vunpack.c.l.b16 %v846
    %v918 = vunpack.c.l.b16 %v847
    %v919 = vunpack.c.l.b16 %v848
    %v920 = vunpack.c.l.b16 %v849
    %v921 = vunpack.c.l.b16 %v850
    %v922 = vunpack.c.l.b16 %v851
    %v923 = vunpack.c.l.b16 %v852
    %v924 = vunpack.c.l.b16 %v853
    %v925 = vunpack.c.l.b16 %v854
    %v926 = vunpack.c.l.b16 %v855
    %v927 = vunpack.c.l.b16 %v856
    %v928 = vunpack.c.l.b16 %v857
    %v929 = vunpack.c.l.b16 %v858
    %v930 = vunpack.c.l.b16 %v859
    %v931 = vunpack.c.l.b16 %v860
    %v932 = vpack.c.b16 %v901, %v900
    %v933 = vpack.c.b16 %v903, %v902
    %v934 = vpack.c.b16 %v905, %v904
    %v935 = vpack.c.b16 %v907, %v906
    %v936 = vpack.c.b16 %v909, %v908
    %v937 = vpack.c.b16 %v911, %v910
    %v938 = vpack.c.b16 %v913, %v912
    %v939 = vpack.c.b16 %v915, %v914
    %v940 = vpack.c.b16 %v917, %v916
    %v941 = vpack.c.b16 %v919, %v918
    %v942 = vpack.c.b16 %v921, %v920
    %v943 = vpack.c.b16 %v923, %v922
    %v944 = vpack.c.b16 %v925, %v924
    %v945 = vpack.c.b16 %v927, %v926
    %v946 = vpack.c.b16 %v929, %v928
    %v947 = vpack.c.b16 %v931, %v930
    %964 = vmatprep.subr.bf16.mxu0 0
    %965 = vmatpush1.bf16.msra.mxu0 %v932
    %966 = vmatprep.subr.bf16.mxu0 0
    %967 = vmatpush1.bf16.msra.mxu0 %v933
    %968 = vmatprep.subr.bf16.mxu0 0
    %969 = vmatpush1.bf16.msra.mxu0 %v934
    %970 = vmatprep.subr.bf16.mxu0 0
    %971 = vmatpush1.bf16.msra.mxu0 %v935
    %972 = vmatprep.subr.bf16.mxu0 0
    %973 = vmatpush1.bf16.msra.mxu0 %v936
    %974 = vmatprep.subr.bf16.mxu0 0
    %975 = vmatpush1.bf16.msra.mxu0 %v937
    %976 = vmatprep.subr.bf16.mxu0 0
    %977 = vmatpush1.bf16.msra.mxu0 %v938
    %978 = vmatprep.subr.bf16.mxu0 0
    %979 = vmatpush1.bf16.msra.mxu0 %v939
    %980 = vmatprep.subr.bf16.mxu0 0
    %981 = vmatpush1.bf16.msra.mxu0 %v940
    %982 = vmatprep.subr.bf16.mxu0 0
    %983 = vmatpush1.bf16.msra.mxu0 %v941
    %984 = vmatprep.subr.bf16.mxu0 0
    %985 = vmatpush1.bf16.msra.mxu0 %v942
    %986 = vmatprep.subr.bf16.mxu0 0
    %987 = vmatpush1.bf16.msra.mxu0 %v943
    %988 = vmatprep.subr.bf16.mxu0 0
    %989 = vmatpush1.bf16.msra.mxu0 %v944
    %990 = vmatprep.subr.bf16.mxu0 0
    %991 = vmatpush1.bf16.msra.mxu0 %v945
    %992 = vmatprep.subr.bf16.mxu0 0
    %993 = vmatpush1.bf16.msra.mxu0 %v946
    %994 = vmatprep.subr.bf16.mxu0 0
    %995 = vmatpush1.bf16.msra.mxu0 %v947
    %996 = vmatprep.mubr.bf16.mxu0 %v828
    %997 = vmatmul.mubr.bf16.gmra.mrb[0].mxu0 %v827
    %v998 = vpop.f32.mrb[0].mxu0
    %v999 = vadd.f32 %v866, %v998
    %v1000 = vpop.f32.mrb[0].mxu0
    %v1001 = vpop.f32.mrb[0].mxu0
    %v1002 = vpop.f32.mrb[0].mxu0
    %1003 = vdwg.mxu0
    %vm1004 = vcmp.gt.f32.partialorder %v999, 0.5
    %v1005 = vsel %vm1004, 1, 0
    %v1006 = vcvt.s32.f32 %v1005
    %vm1007 = vcmask 80896
    %1008 = vst.msk [vmem:[#allocation5] sm:$0xff] %vm1007, %v1006
    %1009 = vst.msk [vmem:[#allocation6] sm:$0xff] %vm1007, %v999
    // Predicated region
    $region26: #{tpu_custom_call.1} parent=1 // pred_check
      _
    $region27: #{tpu_custom_call.1} parent=1 // pred_check_branch
      %1011 = sbr.rel (0) target = $region29
    $region28: #{tpu_custom_call.1} parent=1 // pred_region
      %s1013 = ssub.s32 128, 128
      %1014 = vsyncadd [#allocation4], %s1013
      %s1016 = sshll.u32 [#allocation5], 4
      %s1017 = int_to_ptr.vmem [resolvable:$true] %s1016
      %1019 = dma.vmem_to_hbm [thread:$0]  %s1017, 128, %s5, [#allocation4]
    $region29: #{tpu_custom_call.1} parent=1 // pred_fallthru
      _
    // Predicated region
    $region30: #{tpu_custom_call.1} parent=1 // pred_check
      _
    $region31: #{tpu_custom_call.1} parent=1 // pred_check_branch
      %1021 = sbr.rel (0) target = $region33
    $region32: #{tpu_custom_call.1} parent=1 // pred_region
      %s1023 = ssub.s32 128, 128
      %1024 = vsyncadd [#allocation7], %s1023
      %s1026 = sshll.u32 [#allocation6], 4
      %s1027 = int_to_ptr.vmem [resolvable:$true] %s1026
      %1029 = dma.vmem_to_hbm [thread:$0]  %s1027, 128, %s6, [#allocation7]
    $region33: #{tpu_custom_call.1} parent=1 // pred_fallthru
      _
    // Predicated region
    $region34: #{tpu_custom_call.1} parent=1 // pred_check
      _
    $region35: #{tpu_custom_call.1} parent=1 // pred_check_branch
      %1031 = sbr.rel (0) target = $region37
    $region36: #{tpu_custom_call.1} parent=1 // pred_region
      %1032 = dma.done [#allocation4], 128
    $region37: #{tpu_custom_call.1} parent=1 // pred_fallthru
      _
    // Predicated region
    $region38: #{tpu_custom_call.1} parent=1 // pred_check
      _
    $region39: #{tpu_custom_call.1} parent=1 // pred_check_branch
      %1034 = sbr.rel (0) target = $region41
    $region40: #{tpu_custom_call.1} parent=1 // pred_region
      %1035 = dma.done [#allocation7], 128
    $region41: #{tpu_custom_call.1} parent=1 // pred_fallthru
      _
    %1036 = vsyncpa [#allocation3], 1
    %1037 = vsyncpa [#allocation4], 1
    %1038 = vsyncpa [#allocation7], 1

</llo_original>
